<compile_context>
chip_gen: v6e
topology: v6e:2x2x1
jax: 0.10.0
libtpu: 0.0.40
codegen_flags: <defaults>
</compile_context>

<pallas_src>
import functools

import jax
import jax.numpy as jnp
from jax import lax
from jax.experimental import pallas as pl
from jax.experimental.pallas import tpu as pltpu

BN_EPS = 1e-5
NEG_SLOPE = 0.2
_VMEM_LIMIT = 32 * 1024 * 1024  # explicit scoped-VMEM cap (safe on v5e/v6e/v7x)


def _pick_spatial_tile(p, k_dim, c_out, in_bytes):
    """Largest lane tile that (a) fits a double-buffered VMEM budget, (b) divides p,
    and (c) is a multiple of 128; falls back to the full extent p."""
    per_lane = 2 * (k_dim * in_bytes + c_out * 4)          # xp + y tiles, double-buffered
    budget = 24 * 1024 * 1024
    target = max(128, min(4096, (budget // per_lane) // 128 * 128))
    if p <= target:
        return p
    for t in range(target, 0, -128):
        if p % t == 0:
            return t
    return p


# --------------------- kernel 1: conv + bias + batch-stat accumulation ---------------------

def _conv_stats_kernel(xp_ref, w_ref, b_ref, y_ref, sum_ref, ssq_ref):
    # xp_ref : [K, TP]     im2col patch tile (lanes = spatial positions)
    # w_ref  : [C_out, K]  flattened conv weight
    # b_ref  : [C_out, 1]  conv bias
    # y_ref  : [C_out, TP] conv+bias output tile
    # sum_ref / ssq_ref : [C_out, 1] per-batch-element channel partial sums; resident
    #   (accumulator) across the spatial-tile grid axis, which is marked "arbitrary".
    pt = pl.program_id(1)

    y = jnp.dot(w_ref[...], xp_ref[...], preferred_element_type=jnp.float32)
    y = y + b_ref[...]                                  # [C_out, TP], f32
    y_ref[...] = y.astype(y_ref.dtype)

    @pl.when(pt == 0)
    def _init():
        sum_ref[...] = jnp.zeros_like(sum_ref)
        ssq_ref[...] = jnp.zeros_like(ssq_ref)

    # Channel reductions as ones-vector matmuls on the (otherwise idle) MXU —
    # single pass over y, no cross-sublane XLU reduction, f32 accumulation.
    ones = jnp.ones((y.shape[1], 1), jnp.float32)
    sum_ref[...] += jnp.dot(y, ones, preferred_element_type=jnp.float32)
    ssq_ref[...] += jnp.dot(y * y, ones, preferred_element_type=jnp.float32)


# --------------------- kernel 2: BN normalize (global stats) + LeakyReLU -------------------

def _bn_lrelu_kernel(y_ref, sum_ref, ssq_ref, g_ref, beta_ref, o_ref, *, inv_count):
    # Combine per-batch-element partial stats (tiny [N, C_out, 1] arrays), fold gamma/beta
    # into scale/shift, then one FMA + select pass over the lane-dense y tile.
    s_tot = jnp.sum(sum_ref[...], axis=0)               # [C_out, 1]
    q_tot = jnp.sum(ssq_ref[...], axis=0)               # [C_out, 1]
    mean = s_tot * inv_count
    var = q_tot * inv_count - mean * mean               # biased (training-mode) variance
    scale = g_ref[...] * lax.rsqrt(var + BN_EPS)        # [C_out, 1], rsqrt on EUP
    shift = beta_ref[...] - mean * scale

    yn = y_ref[...].astype(jnp.float32) * scale + shift
    o_ref[...] = jnp.where(yn >= 0.0, yn, NEG_SLOPE * yn).astype(o_ref.dtype)


# --------------------- wrapper --------------------------------------------------------------

@functools.partial(jax.jit, static_argnames=("kernel_size", "mxu_dtype"))
def vae_encoder_block(x_nchw, conv_w, conv_b, bn_gamma, bn_beta, kernel_size,
                      mxu_dtype=jnp.float32):
    """Forward pass of VAEEncoderBlock. Returns NCHW output."""
    n, c_in, h, w = x_nchw.shape
    c_out = conv_w.shape[0]
    stride = 2
    pad = kernel_size // 2
    ho = (h + 2 * pad - kernel_size) // stride + 1
    wo = (w + 2 * pad - kernel_size) // stride + 1
    p = ho * wo
    k_dim = c_in * kernel_size * kernel_size

    # Patches in [N, K, P] layout: K ordered (C_in major, then kh, kw) to match
    # conv_w.reshape(C_out, -1); P = Ho*Wo is the lane dimension.  The reshape merges
    # adjacent dims only (no extra HBM transpose pass).
    x_pad = jnp.pad(x_nchw, ((0, 0), (0, 0), (pad, pad), (pad, pad)))
    taps = []
    for ki in range(kernel_size):
        for kj in range(kernel_size):
            taps.append(x_pad[:, :, ki:ki + stride * ho:stride,
                              kj:kj + stride * wo:stride])          # [N, C_in, Ho, Wo]
    patches = jnp.stack(taps, axis=2)                               # [N, C_in, k*k, Ho, Wo]
    patches = patches.reshape(n, k_dim, p).astype(mxu_dtype)        # [N, K, P]

    w_flat = conv_w.reshape(c_out, k_dim).astype(mxu_dtype)         # [C_out, K]
    b_col = conv_b.reshape(c_out, 1).astype(jnp.float32)
    g_col = bn_gamma.reshape(c_out, 1).astype(jnp.float32)
    beta_col = bn_beta.reshape(c_out, 1).astype(jnp.float32)

    in_bytes = jnp.dtype(mxu_dtype).itemsize
    tp = _pick_spatial_tile(p, k_dim, c_out, in_bytes)
    n_pt = p // tp
    grid = (n, n_pt)

    # y intermediate stored at mxu_dtype: halves the inter-phase HBM roundtrip for bf16;
    # statistics are always accumulated in f32 from the pre-cast f32 conv result.
    y_dtype = mxu_dtype

    # ---- phase 1: conv + bias, per-(batch, channel) sum / sum-of-squares ----
    y, psum, pssq = pl.pallas_call(
        _conv_stats_kernel,
        out_shape=(
            jax.ShapeDtypeStruct((n, c_out, p), y_dtype),
            jax.ShapeDtypeStruct((n, c_out, 1), jnp.float32),
            jax.ShapeDtypeStruct((n, c_out, 1), jnp.float32),
        ),
        grid=grid,
        in_specs=[
            pl.BlockSpec((None, k_dim, tp), lambda b, t: (b, 0, t)),
            pl.BlockSpec((c_out, k_dim), lambda b, t: (0, 0)),
            pl.BlockSpec((c_out, 1), lambda b, t: (0, 0)),
        ],
        out_specs=(
            pl.BlockSpec((None, c_out, tp), lambda b, t: (b, 0, t)),
            pl.BlockSpec((None, c_out, 1), lambda b, t: (b, 0, 0)),
            pl.BlockSpec((None, c_out, 1), lambda b, t: (b, 0, 0)),
        ),
        compiler_params=pltpu.CompilerParams(
            dimension_semantics=("parallel", "arbitrary"),
            vmem_limit_bytes=_VMEM_LIMIT),
    )(patches, w_flat, b_col)

    # ---- phase 2: BN with globally combined batch stats + LeakyReLU (elementwise) ----
    out_flat = pl.pallas_call(
        functools.partial(_bn_lrelu_kernel, inv_count=1.0 / float(n * p)),
        out_shape=jax.ShapeDtypeStruct((n, c_out, p), x_nchw.dtype),
        grid=grid,
        in_specs=[
            pl.BlockSpec((None, c_out, tp), lambda b, t: (b, 0, t)),
            pl.BlockSpec((n, c_out, 1), lambda b, t: (0, 0, 0)),
            pl.BlockSpec((n, c_out, 1), lambda b, t: (0, 0, 0)),
            pl.BlockSpec((c_out, 1), lambda b, t: (0, 0)),
            pl.BlockSpec((c_out, 1), lambda b, t: (0, 0)),
        ],
        out_specs=pl.BlockSpec((None, c_out, tp), lambda b, t: (b, 0, t)),
        compiler_params=pltpu.CompilerParams(
            dimension_semantics=("parallel", "parallel"),
            vmem_limit_bytes=_VMEM_LIMIT),
    )(y, psum, pssq, g_col, beta_col)

    # [N, C_out, Ho*Wo] -> [N, C_out, Ho, Wo]: contiguous split, no HBM transpose.
    return out_flat.reshape(n, c_out, ho, wo)


# --------------------- pure-JAX reference (PyTorch semantics) -------------------------------

def _reference(x_nchw, conv_w, conv_b, bn_gamma, bn_beta, kernel_size):
    stride = 2
    padding = kernel_size // 2
    y = lax.conv_general_dilated(
        x_nchw, conv_w,
        window_strides=(stride, stride),
        padding=((padding, padding), (padding, padding)),
        dimension_numbers=("NCHW", "OIHW", "NCHW"),
    ) + conv_b.reshape(1, -1, 1, 1)
    mean = jnp.mean(y, axis=(0, 2, 3), keepdims=True)
    var = jnp.mean((y - mean) ** 2, axis=(0, 2, 3), keepdims=True)
    normed = (y - mean) * lax.rsqrt(var + BN_EPS)
    normed = normed * bn_gamma.reshape(1, -1, 1, 1) + bn_beta.reshape(1, -1, 1, 1)
    return jnp.where(normed >= 0, normed, NEG_SLOPE * normed)


if __name__ == "__main__":
    # Small shapes consistent with the module: N=2, C_in=4, H=W=16, C_out=8, k=3.
    N, C_IN, H, W = 2, 4, 16, 16
    C_OUT, K = 8, 3

    key = jax.random.PRNGKey(0)
    kx, kw, kb, kg, kbt = jax.random.split(key, 5)

    x = jax.random.normal(kx, (N, C_IN, H, W), dtype=jnp.float32)
    conv_w = 0.1 * jax.random.normal(kw, (C_OUT, C_IN, K, K), dtype=jnp.float32)
    conv_b = 0.1 * jax.random.normal(kb, (C_OUT,), dtype=jnp.float32)
    bn_gamma = 1.0 + 0.1 * jax.random.normal(kg, (C_OUT,), dtype=jnp.float32)
    bn_beta = 0.1 * jax.random.normal(kbt, (C_OUT,), dtype=jnp.float32)

    ref = _reference(x, conv_w, conv_b, bn_gamma, bn_beta, K)

    # f32 path (tight check).
    out = vae_encoder_block(x, conv_w, conv_b, bn_gamma, bn_beta, K)
    out = jax.block_until_ready(out)
    assert out.shape == (N, C_OUT, H // 2, W // 2), out.shape
    assert jnp.max(jnp.abs(out - ref)) < 1e-3, float(jnp.max(jnp.abs(out - ref)))

    # bf16 MXU-feed path (v6e/v7x): f32 accumulation + f32 BN stats keep accuracy.
    out_bf16 = vae_encoder_block(x, conv_w, conv_b, bn_gamma, bn_beta, K,
                                 mxu_dtype=jnp.bfloat16)
    out_bf16 = jax.block_until_ready(out_bf16)
    assert jnp.max(jnp.abs(out_bf16 - ref)) < 1e-1, float(jnp.max(jnp.abs(out_bf16 - ref)))

    print("KERNEL_OK")
</pallas_src>

<mosaic_0001>
module attributes {stable_mosaic.version = 11 : i64} {
  func.func @_conv_stats_kernel(%arg0: i32, %arg1: i32, %arg2: memref<1x36x64xf32, #tpu.memory_space<vmem>>, %arg3: memref<8x36xf32, #tpu.memory_space<vmem>>, %arg4: memref<8x1xf32, #tpu.memory_space<vmem>>, %arg5: memref<1x8x64xf32, #tpu.memory_space<vmem>>, %arg6: memref<1x8x1xf32, #tpu.memory_space<vmem>>, %arg7: memref<1x8x1xf32, #tpu.memory_space<vmem>>) attributes {dimension_semantics = [#tpu.dimension_semantics<parallel>, #tpu.dimension_semantics<arbitrary>], iteration_bounds = array<i64: 2, 1>, scalar_prefetch = 0 : i64, scratch_operands = 0 : i64, tpu.core_type = #tpu.core_type<tc>, window_params = [{transform_indices = @transform_0, window_bounds = array<i64: 1, 36, 64>}, {pipeline_mode = #tpu.pipeline_mode<synchronous>, transform_indices = @transform_1, window_bounds = array<i64: 8, 36>}, {pipeline_mode = #tpu.pipeline_mode<synchronous>, transform_indices = @transform_2, window_bounds = array<i64: 8, 1>}, {transform_indices = @transform_3, window_bounds = array<i64: 1, 8, 64>}, {transform_indices = @transform_4, window_bounds = array<i64: 1, 8, 1>}, {transform_indices = @transform_5, window_bounds = array<i64: 1, 8, 1>}]} {
    %c0 = arith.constant 0 : index
    %c0_0 = arith.constant 0 : index
    %0 = vector.load %arg3[%c0, %c0_0] : memref<8x36xf32, #tpu.memory_space<vmem>>, vector<8x36xf32>
    %c0_1 = arith.constant 0 : index
    %c0_2 = arith.constant 0 : index
    %c0_3 = arith.constant 0 : index
    %1 = vector.load %arg2[%c0_1, %c0_2, %c0_3] : memref<1x36x64xf32, #tpu.memory_space<vmem>>, vector<1x36x64xf32>
    %2 = vector.shape_cast %1 : vector<1x36x64xf32> to vector<36x64xf32>
    %cst = arith.constant dense<0.000000e+00> : vector<8x64xf32>
    %3 = tpu.matmul %0, %2, %cst {dimension_numbers = #tpu.dot_dimension_numbers<[1], [0], [0], [1], [0, 0, 1, 1], [], []>} : vector<8x36xf32>, vector<36x64xf32>, vector<8x64xf32> -> vector<8x64xf32>
    %c0_4 = arith.constant 0 : index
    %c0_5 = arith.constant 0 : index
    %4 = vector.load %arg4[%c0_4, %c0_5] : memref<8x1xf32, #tpu.memory_space<vmem>>, vector<8x1xf32>
    %5 = vector.broadcast %4 : vector<8x1xf32> to vector<8x64xf32>
    %6 = arith.addf %3, %5 : vector<8x64xf32>
    %c0_6 = arith.constant 0 : index
    %c0_7 = arith.constant 0 : index
    %c0_8 = arith.constant 0 : index
    %7 = vector.load %arg5[%c0_6, %c0_7, %c0_8] : memref<1x8x64xf32, #tpu.memory_space<vmem>>, vector<1x8x64xf32>
    %8 = vector.shape_cast %7 : vector<1x8x64xf32> to vector<8x64xf32>
    %9 = vector.shape_cast %6 : vector<8x64xf32> to vector<1x8x64xf32>
    tpu.vector_store %arg5[%c0_6, %c0_7, %c0_8], %9 {strides = array<i32>} : memref<1x8x64xf32, #tpu.memory_space<vmem>>, vector<1x8x64xf32>,
    %c0_i32 = arith.constant 0 : i32
    %10 = arith.cmpi eq, %arg1, %c0_i32 : i32
    %11 = arith.extui %10 : i1 to i32
    %c0_i32_9 = arith.constant 0 : i32
    %12 = arith.cmpi ne, %11, %c0_i32_9 : i32
    scf.if %12 {
      %cst_25 = arith.constant 0.000000e+00 : f32
      %29 = vector.broadcast %cst_25 : f32 to vector<8x1xf32>
      %c0_26 = arith.constant 0 : index
      %c0_27 = arith.constant 0 : index
      %c0_28 = arith.constant 0 : index
      %30 = vector.load %arg6[%c0_26, %c0_27, %c0_28] : memref<1x8x1xf32, #tpu.memory_space<vmem>>, vector<1x8x1xf32>
      %31 = vector.shape_cast %30 : vector<1x8x1xf32> to vector<8x1xf32>
      %32 = vector.shape_cast %29 : vector<8x1xf32> to vector<1x8x1xf32>
      tpu.vector_store %arg6[%c0_26, %c0_27, %c0_28], %32 {strides = array<i32>} : memref<1x8x1xf32, #tpu.memory_space<vmem>>, vector<1x8x1xf32>,
      %cst_29 = arith.constant 0.000000e+00 : f32
      %33 = vector.broadcast %cst_29 : f32 to vector<8x1xf32>
      %c0_30 = arith.constant 0 : index
      %c0_31 = arith.constant 0 : index
      %c0_32 = arith.constant 0 : index
      %34 = vector.load %arg7[%c0_30, %c0_31, %c0_32] : memref<1x8x1xf32, #tpu.memory_space<vmem>>, vector<1x8x1xf32>
      %35 = vector.shape_cast %34 : vector<1x8x1xf32> to vector<8x1xf32>
      %36 = vector.shape_cast %33 : vector<8x1xf32> to vector<1x8x1xf32>
      tpu.vector_store %arg7[%c0_30, %c0_31, %c0_32], %36 {strides = array<i32>} : memref<1x8x1xf32, #tpu.memory_space<vmem>>, vector<1x8x1xf32>,
    } else {
    }
    %cst_10 = arith.constant 1.000000e+00 : f32
    %13 = vector.broadcast %cst_10 : f32 to vector<64x1xf32>
    %c0_11 = arith.constant 0 : index
    %c0_12 = arith.constant 0 : index
    %c0_13 = arith.constant 0 : index
    %14 = vector.load %arg6[%c0_11, %c0_12, %c0_13] : memref<1x8x1xf32, #tpu.memory_space<vmem>>, vector<1x8x1xf32>
    %15 = vector.shape_cast %14 : vector<1x8x1xf32> to vector<8x1xf32>
    %cst_14 = arith.constant dense<0.000000e+00> : vector<8x1xf32>
    %16 = tpu.matmul %6, %13, %cst_14 {dimension_numbers = #tpu.dot_dimension_numbers<[1], [0], [0], [1], [0, 0, 1, 1], [], []>} : vector<8x64xf32>, vector<64x1xf32>, vector<8x1xf32> -> vector<8x1xf32>
    %17 = arith.addf %15, %16 : vector<8x1xf32>
    %c0_15 = arith.constant 0 : index
    %c0_16 = arith.constant 0 : index
    %c0_17 = arith.constant 0 : index
    %18 = vector.load %arg6[%c0_15, %c0_16, %c0_17] : memref<1x8x1xf32, #tpu.memory_space<vmem>>, vector<1x8x1xf32>
    %19 = vector.shape_cast %18 : vector<1x8x1xf32> to vector<8x1xf32>
    %20 = vector.shape_cast %17 : vector<8x1xf32> to vector<1x8x1xf32>
    tpu.vector_store %arg6[%c0_15, %c0_16, %c0_17], %20 {strides = array<i32>} : memref<1x8x1xf32, #tpu.memory_space<vmem>>, vector<1x8x1xf32>,
    %c0_18 = arith.constant 0 : index
    %c0_19 = arith.constant 0 : index
    %c0_20 = arith.constant 0 : index
    %21 = vector.load %arg7[%c0_18, %c0_19, %c0_20] : memref<1x8x1xf32, #tpu.memory_space<vmem>>, vector<1x8x1xf32>
    %22 = vector.shape_cast %21 : vector<1x8x1xf32> to vector<8x1xf32>
    %23 = arith.mulf %6, %6 : vector<8x64xf32>
    %cst_21 = arith.constant dense<0.000000e+00> : vector<8x1xf32>
    %24 = tpu.matmul %23, %13, %cst_21 {dimension_numbers = #tpu.dot_dimension_numbers<[1], [0], [0], [1], [0, 0, 1, 1], [], []>} : vector<8x64xf32>, vector<64x1xf32>, vector<8x1xf32> -> vector<8x1xf32>
    %25 = arith.addf %22, %24 : vector<8x1xf32>
    %c0_22 = arith.constant 0 : index
    %c0_23 = arith.constant 0 : index
    %c0_24 = arith.constant 0 : index
    %26 = vector.load %arg7[%c0_22, %c0_23, %c0_24] : memref<1x8x1xf32, #tpu.memory_space<vmem>>, vector<1x8x1xf32>
    %27 = vector.shape_cast %26 : vector<1x8x1xf32> to vector<8x1xf32>
    %28 = vector.shape_cast %25 : vector<8x1xf32> to vector<1x8x1xf32>
    tpu.vector_store %arg7[%c0_22, %c0_23, %c0_24], %28 {strides = array<i32>} : memref<1x8x1xf32, #tpu.memory_space<vmem>>, vector<1x8x1xf32>,
    return
  }
  func.func @transform_0(%arg0: i32, %arg1: i32) -> (i32, i32, i32) {
    %c0_i32 = arith.constant 0 : i32
    %c0_i32_0 = arith.constant 0 : i32
    return %arg0, %c0_i32, %arg1 : i32, i32, i32
  }
  func.func @transform_1(%arg0: i32, %arg1: i32) -> (i32, i32) {
    %c0_i32 = arith.constant 0 : i32
    %c0_i32_0 = arith.constant 0 : i32
    %c0_i32_1 = arith.constant 0 : i32
    return %c0_i32, %c0_i32_0 : i32, i32
  }
  func.func @transform_2(%arg0: i32, %arg1: i32) -> (i32, i32) {
    %c0_i32 = arith.constant 0 : i32
    %c0_i32_0 = arith.constant 0 : i32
    %c0_i32_1 = arith.constant 0 : i32
    return %c0_i32, %c0_i32_0 : i32, i32
  }
  func.func @transform_3(%arg0: i32, %arg1: i32) -> (i32, i32, i32) {
    %c0_i32 = arith.constant 0 : i32
    %c0_i32_0 = arith.constant 0 : i32
    return %arg0, %c0_i32, %arg1 : i32, i32, i32
  }
  func.func @transform_4(%arg0: i32, %arg1: i32) -> (i32, i32, i32) {
    %c0_i32 = arith.constant 0 : i32
    %c0_i32_0 = arith.constant 0 : i32
    %c0_i32_1 = arith.constant 0 : i32
    return %arg0, %c0_i32, %c0_i32_0 : i32, i32, i32
  }
  func.func @transform_5(%arg0: i32, %arg1: i32) -> (i32, i32, i32) {
    %c0_i32 = arith.constant 0 : i32
    %c0_i32_0 = arith.constant 0 : i32
    %c0_i32_1 = arith.constant 0 : i32
    return %arg0, %c0_i32, %c0_i32_0 : i32, i32, i32
  }
}

module attributes {stable_mosaic.version = 11 : i64} {
  func.func @_bn_lrelu_kernel(%arg0: i32, %arg1: i32, %arg2: memref<1x8x64xf32, #tpu.memory_space<vmem>>, %arg3: memref<2x8x1xf32, #tpu.memory_space<vmem>>, %arg4: memref<2x8x1xf32, #tpu.memory_space<vmem>>, %arg5: memref<8x1xf32, #tpu.memory_space<vmem>>, %arg6: memref<8x1xf32, #tpu.memory_space<vmem>>, %arg7: memref<1x8x64xf32, #tpu.memory_space<vmem>>) attributes {dimension_semantics = [#tpu.dimension_semantics<parallel>, #tpu.dimension_semantics<parallel>], iteration_bounds = array<i64: 2, 1>, scalar_prefetch = 0 : i64, scratch_operands = 0 : i64, tpu.core_type = #tpu.core_type<tc>, window_params = [{transform_indices = @transform_0, window_bounds = array<i64: 1, 8, 64>}, {pipeline_mode = #tpu.pipeline_mode<synchronous>, transform_indices = @transform_1, window_bounds = array<i64: 2, 8, 1>}, {pipeline_mode = #tpu.pipeline_mode<synchronous>, transform_indices = @transform_2, window_bounds = array<i64: 2, 8, 1>}, {pipeline_mode = #tpu.pipeline_mode<synchronous>, transform_indices = @transform_3, window_bounds = array<i64: 8, 1>}, {pipeline_mode = #tpu.pipeline_mode<synchronous>, transform_indices = @transform_4, window_bounds = array<i64: 8, 1>}, {transform_indices = @transform_5, window_bounds = array<i64: 1, 8, 64>}]} {
    %c0 = arith.constant 0 : index
    %c0_0 = arith.constant 0 : index
    %c0_1 = arith.constant 0 : index
    %0 = vector.load %arg3[%c0, %c0_0, %c0_1] : memref<2x8x1xf32, #tpu.memory_space<vmem>>, vector<2x8x1xf32>
    %cst = arith.constant dense<0.000000e+00> : vector<8x1xf32>
    %1 = vector.multi_reduction <add>, %0, %cst [0] : vector<2x8x1xf32> to vector<8x1xf32>
    %c0_2 = arith.constant 0 : index
    %c0_3 = arith.constant 0 : index
    %c0_4 = arith.constant 0 : index
    %2 = vector.load %arg4[%c0_2, %c0_3, %c0_4] : memref<2x8x1xf32, #tpu.memory_space<vmem>>, vector<2x8x1xf32>
    %cst_5 = arith.constant dense<0.000000e+00> : vector<8x1xf32>
    %3 = vector.multi_reduction <add>, %2, %cst_5 [0] : vector<2x8x1xf32> to vector<8x1xf32>
    %cst_6 = arith.constant 7.812500e-03 : f32
    %4 = vector.broadcast %cst_6 : f32 to vector<8x1xf32>
    %5 = arith.mulf %1, %4 : vector<8x1xf32>
    %cst_7 = arith.constant 7.812500e-03 : f32
    %6 = vector.broadcast %cst_7 : f32 to vector<8x1xf32>
    %7 = arith.mulf %3, %6 : vector<8x1xf32>
    %8 = arith.mulf %5, %5 : vector<8x1xf32>
    %9 = arith.subf %7, %8 : vector<8x1xf32>
    %c0_8 = arith.constant 0 : index
    %c0_9 = arith.constant 0 : index
    %10 = vector.load %arg5[%c0_8, %c0_9] : memref<8x1xf32, #tpu.memory_space<vmem>>, vector<8x1xf32>
    %cst_10 = arith.constant 9.99999974E-6 : f32
    %11 = vector.broadcast %cst_10 : f32 to vector<8x1xf32>
    %12 = arith.addf %9, %11 : vector<8x1xf32>
    %13 = math.rsqrt %12 : vector<8x1xf32>
    %14 = arith.mulf %10, %13 : vector<8x1xf32>
    %c0_11 = arith.constant 0 : index
    %c0_12 = arith.constant 0 : index
    %15 = vector.load %arg6[%c0_11, %c0_12] : memref<8x1xf32, #tpu.memory_space<vmem>>, vector<8x1xf32>
    %16 = arith.mulf %5, %14 : vector<8x1xf32>
    %17 = arith.subf %15, %16 : vector<8x1xf32>
    %c0_13 = arith.constant 0 : index
    %c0_14 = arith.constant 0 : index
    %c0_15 = arith.constant 0 : index
    %18 = vector.load %arg2[%c0_13, %c0_14, %c0_15] : memref<1x8x64xf32, #tpu.memory_space<vmem>>, vector<1x8x64xf32>
    %19 = vector.shape_cast %18 : vector<1x8x64xf32> to vector<8x64xf32>
    %20 = vector.broadcast %14 : vector<8x1xf32> to vector<8x64xf32>
    %21 = arith.mulf %19, %20 : vector<8x64xf32>
    %22 = vector.broadcast %17 : vector<8x1xf32> to vector<8x64xf32>
    %23 = arith.addf %21, %22 : vector<8x64xf32>
    %cst_16 = arith.constant 0.000000e+00 : f32
    %24 = vector.broadcast %cst_16 : f32 to vector<8x64xf32>
    %25 = arith.cmpf oge, %23, %24 : vector<8x64xf32>
    %cst_17 = arith.constant 2.000000e-01 : f32
    %26 = vector.broadcast %cst_17 : f32 to vector<8x64xf32>
    %27 = arith.mulf %26, %23 : vector<8x64xf32>
    %28 = arith.select %25, %23, %27 : vector<8x64xi1>, vector<8x64xf32>
    %c0_18 = arith.constant 0 : index
    %c0_19 = arith.constant 0 : index
    %c0_20 = arith.constant 0 : index
    %29 = vector.load %arg7[%c0_18, %c0_19, %c0_20] : memref<1x8x64xf32, #tpu.memory_space<vmem>>, vector<1x8x64xf32>
    %30 = vector.shape_cast %29 : vector<1x8x64xf32> to vector<8x64xf32>
    %31 = vector.shape_cast %28 : vector<8x64xf32> to vector<1x8x64xf32>
    tpu.vector_store %arg7[%c0_18, %c0_19, %c0_20], %31 {strides = array<i32>} : memref<1x8x64xf32, #tpu.memory_space<vmem>>, vector<1x8x64xf32>,
    return
  }
  func.func @transform_0(%arg0: i32, %arg1: i32) -> (i32, i32, i32) {
    %c0_i32 = arith.constant 0 : i32
    %c0_i32_0 = arith.constant 0 : i32
    return %arg0, %c0_i32, %arg1 : i32, i32, i32
  }
  func.func @transform_1(%arg0: i32, %arg1: i32) -> (i32, i32, i32) {
    %c0_i32 = arith.constant 0 : i32
    %c0_i32_0 = arith.constant 0 : i32
    %c0_i32_1 = arith.constant 0 : i32
    %c0_i32_2 = arith.constant 0 : i32
    return %c0_i32, %c0_i32_0, %c0_i32_1 : i32, i32, i32
  }
  func.func @transform_2(%arg0: i32, %arg1: i32) -> (i32, i32, i32) {
    %c0_i32 = arith.constant 0 : i32
    %c0_i32_0 = arith.constant 0 : i32
    %c0_i32_1 = arith.constant 0 : i32
    %c0_i32_2 = arith.constant 0 : i32
    return %c0_i32, %c0_i32_0, %c0_i32_1 : i32, i32, i32
  }
  func.func @transform_3(%arg0: i32, %arg1: i32) -> (i32, i32) {
    %c0_i32 = arith.constant 0 : i32
    %c0_i32_0 = arith.constant 0 : i32
    %c0_i32_1 = arith.constant 0 : i32
    return %c0_i32, %c0_i32_0 : i32, i32
  }
  func.func @transform_4(%arg0: i32, %arg1: i32) -> (i32, i32) {
    %c0_i32 = arith.constant 0 : i32
    %c0_i32_0 = arith.constant 0 : i32
    %c0_i32_1 = arith.constant 0 : i32
    return %c0_i32, %c0_i32_0 : i32, i32
  }
  func.func @transform_5(%arg0: i32, %arg1: i32) -> (i32, i32, i32) {
    %c0_i32 = arith.constant 0 : i32
    %c0_i32_0 = arith.constant 0 : i32
    return %arg0, %c0_i32, %arg1 : i32, i32, i32
  }
}

</mosaic_0001>

<llo_original>
// kernel: vae_encoder_block.3
$region0: #{vae_encoder_block.3}
  #allocation0 [shape = 'u32[]', space=smem, size = 0x4, offset = 0x4, fixed_abs, tag = 'smem constant byte address 0x4 - core index']
  #allocation1 [shape = 'u32[144,128]{1,0:T(1,128)}', space=vmem, size = 0x12000, scoped, tag = 'internal scratch']
  %s0 = inlined_call_operand.vmem [shape: f32[2,8,64], index: 0, kind: input, shape index: {}]
  %s1 = inlined_call_operand.vmem [shape: f32[2,8,1], index: 1, kind: input, shape index: {}]
  %s2 = inlined_call_operand.vmem [shape: f32[2,8,1], index: 2, kind: input, shape index: {}]
  %s3 = inlined_call_operand.vmem [shape: f32[8,1], index: 3, kind: input, shape index: {}]
  %s4 = inlined_call_operand.vmem [shape: f32[8,1], index: 4, kind: input, shape index: {}]
  %s5 = inlined_call_operand.vmem [shape: f32[2,8,64], index: 5, kind: output, shape index: {}]
  %s6 = sld [smem:[#allocation0]]
  $region53: #{vae_encoder_block.3} parent=0
    _
  %s8 = ssub.s32 1, %s6
  %s9 = scalar_select 0, %s8, %s6
  loop: start=0, step=1, limit=4
  $region2: #{vae_encoder_block.3} parent=0 // loop_pre_header
    _
  $region3: #{vae_encoder_block.3} parent=0 // loop_header
    %s11 = sphi 0, %s15
    %p12 = scmp.ge.s32.totalorder %s11, 4
    %s18 = sphi 0, %s30
    %s19 = sphi 0, %s26
    %s20 = sphi 0, %s18
    %s21 = sphi 0, %s19
    %s22 = sphi 0, %s20
    %s23 = sphi 0, %s21
    %s35 = sphi 0, %s37
    %s38 = sphi 0, %s35
    %s39 = sphi 0, %s38
    %s55 = sphi 0, %s39
    %s59 = sphi 0, %s59
    %s61 = sphi 0, %s59
    %s62 = sphi 0, %s61
    %s76 = sphi 0, %s62
    %s80 = sphi 0, %s80
    %s82 = sphi 0, %s80
    %s83 = sphi 0, %s82
    %s97 = sphi 0, %s83
    %s101 = sphi 0, %s101
    %s103 = sphi 0, %s101
    %s104 = sphi 0, %s103
    %s118 = sphi 0, %s104
    %s122 = sphi 0, %s122
    %s124 = sphi 0, %s122
    %s125 = sphi 0, %s124
    %s139 = sphi 0, %s125
    %s147 = sphi 0, %s149
    %s150 = sphi 0, %s147
    %s151 = sphi 0, %s150
    %s167 = sphi 0, %s151
  $region4: #{vae_encoder_block.3} parent=0 // loop_header_branch
    %14 = sbr.rel (%p12) target = $region8
  $region5: #{vae_encoder_block.3} parent=0 // loop_body
    %s16 = ssub.s32 %s11, 1
    %s17 = ssub.s32 %s11, 2
    %s24 = sadd.s32 1, %s19
    %p25 = scmp.ge.s32.totalorder %s24, 1
    %s26 = scalar_select %p25, 0, %s24
    %s27 = sadd.s32 1, %s18
    %s28 = scalar_select %p25, %s27, %s18
    %p29 = scmp.ge.s32.totalorder %s28, 2
    %s30 = scalar_select %p29, 0, %s28
    %s31 = ssub.s32 %s18, %s30
    %s32 = ssub.s32 %s19, %s26
    %s33 = sor.u32 %s31, %s32
    %p34 = scmp.eq.s32.totalorder %s33, 0
    %s36 = sadd.s32 %s35, 1
    %s37 = scalar_select %p34, %s35, %s36
    %p40 = pneg %p34
    %p41 = scmp.eq.s32.totalorder %s11, 1
    %p42 = por %p40, %p41
    %p43 = scmp.ne.s32.totalorder %s35, %s38
    %p44 = scmp.eq.s32.totalorder %s11, 0
    %p45 = por %p43, %p44
    %p46 = scmp.ne.s32.totalorder %s35, %s38
    %p47 = scmp.eq.s32.totalorder %s16, 1
    %p48 = por %p46, %p47
    %p49 = scmp.ne.s32.totalorder %s38, %s39
    %p50 = scmp.eq.s32.totalorder %s16, 0
    %p51 = por %p49, %p50
    %p52 = scmp.ne.s32.totalorder %s38, %s39
    %p53 = scmp.eq.s32.totalorder %s17, 1
    %p54 = por %p52, %p53
    %p56 = scmp.ne.s32.totalorder %s39, %s55
    %p57 = scmp.eq.s32.totalorder %s17, 0
    %p58 = por %p56, %p57
    %s60 = sadd.s32 %s59, 1
    %p63 = scmp.eq.s32.totalorder %s11, 1
    %p64 = scmp.ne.s32.totalorder %s59, %s61
    %p65 = scmp.eq.s32.totalorder %s11, 0
    %p66 = por %p64, %p65
    %p67 = scmp.ne.s32.totalorder %s59, %s61
    %p68 = scmp.eq.s32.totalorder %s16, 1
    %p69 = por %p67, %p68
    %p70 = scmp.ne.s32.totalorder %s61, %s62
    %p71 = scmp.eq.s32.totalorder %s16, 0
    %p72 = por %p70, %p71
    %p73 = scmp.ne.s32.totalorder %s61, %s62
    %p74 = scmp.eq.s32.totalorder %s17, 1
    %p75 = por %p73, %p74
    %p77 = scmp.ne.s32.totalorder %s62, %s76
    %p78 = scmp.eq.s32.totalorder %s17, 0
    %p79 = por %p77, %p78
    %s81 = sadd.s32 %s80, 1
    %p84 = scmp.eq.s32.totalorder %s11, 1
    %p85 = scmp.ne.s32.totalorder %s80, %s82
    %p86 = scmp.eq.s32.totalorder %s11, 0
    %p87 = por %p85, %p86
    %p88 = scmp.ne.s32.totalorder %s80, %s82
    %p89 = scmp.eq.s32.totalorder %s16, 1
    %p90 = por %p88, %p89
    %p91 = scmp.ne.s32.totalorder %s82, %s83
    %p92 = scmp.eq.s32.totalorder %s16, 0
    %p93 = por %p91, %p92
    %p94 = scmp.ne.s32.totalorder %s82, %s83
    %p95 = scmp.eq.s32.totalorder %s17, 1
    %p96 = por %p94, %p95
    %p98 = scmp.ne.s32.totalorder %s83, %s97
    %p99 = scmp.eq.s32.totalorder %s17, 0
    %p100 = por %p98, %p99
    %s102 = sadd.s32 %s101, 1
    %p105 = scmp.eq.s32.totalorder %s11, 1
    %p106 = scmp.ne.s32.totalorder %s101, %s103
    %p107 = scmp.eq.s32.totalorder %s11, 0
    %p108 = por %p106, %p107
    %p109 = scmp.ne.s32.totalorder %s101, %s103
    %p110 = scmp.eq.s32.totalorder %s16, 1
    %p111 = por %p109, %p110
    %p112 = scmp.ne.s32.totalorder %s103, %s104
    %p113 = scmp.eq.s32.totalorder %s16, 0
    %p114 = por %p112, %p113
    %p115 = scmp.ne.s32.totalorder %s103, %s104
    %p116 = scmp.eq.s32.totalorder %s17, 1
    %p117 = por %p115, %p116
    %p119 = scmp.ne.s32.totalorder %s104, %s118
    %p120 = scmp.eq.s32.totalorder %s17, 0
    %p121 = por %p119, %p120
    %s123 = sadd.s32 %s122, 1
    %p126 = scmp.eq.s32.totalorder %s11, 1
    %p127 = scmp.ne.s32.totalorder %s122, %s124
    %p128 = scmp.eq.s32.totalorder %s11, 0
    %p129 = por %p127, %p128
    %p130 = scmp.ne.s32.totalorder %s122, %s124
    %p131 = scmp.eq.s32.totalorder %s16, 1
    %p132 = por %p130, %p131
    %p133 = scmp.ne.s32.totalorder %s124, %s125
    %p134 = scmp.eq.s32.totalorder %s16, 0
    %p135 = por %p133, %p134
    %p136 = scmp.ne.s32.totalorder %s124, %s125
    %p137 = scmp.eq.s32.totalorder %s17, 1
    %p138 = por %p136, %p137
    %p140 = scmp.ne.s32.totalorder %s125, %s139
    %p141 = scmp.eq.s32.totalorder %s17, 0
    %p142 = por %p140, %p141
    %s143 = ssub.s32 %s18, %s30
    %s144 = ssub.s32 %s19, %s26
    %s145 = sor.u32 %s143, %s144
    %p146 = scmp.eq.s32.totalorder %s145, 0
    %s148 = sadd.s32 %s147, 1
    %s149 = scalar_select %p146, %s147, %s148
    %p152 = pneg %p146
    %p153 = scmp.eq.s32.totalorder %s11, 1
    %p154 = por %p152, %p153
    %p155 = scmp.ne.s32.totalorder %s147, %s150
    %p156 = scmp.eq.s32.totalorder %s11, 0
    %p157 = por %p155, %p156
    %p158 = scmp.ne.s32.totalorder %s147, %s150
    %p159 = scmp.eq.s32.totalorder %s16, 1
    %p160 = por %p158, %p159
    %p161 = scmp.ne.s32.totalorder %s150, %s151
    %p162 = scmp.eq.s32.totalorder %s16, 0
    %p163 = por %p161, %p162
    %p164 = scmp.ne.s32.totalorder %s150, %s151
    %p165 = scmp.eq.s32.totalorder %s17, 1
    %p166 = por %p164, %p165
    %p168 = scmp.ne.s32.totalorder %s151, %s167
    %p169 = scmp.eq.s32.totalorder %s17, 0
    %p170 = por %p168, %p169
    %p171 = scmp.le.s32.totalorder 1, %s11
    %p172 = scmp.lt.s32.totalorder %s11, 3
    %p173 = pnand %p171, %p172
    %p174 = pneg %p173
    // Predicated region
    $region9: #{vae_encoder_block.3} parent=5 // pred_check
      _
    $region10: #{vae_encoder_block.3} parent=5 // pred_check_branch
      %176 = sbr.rel (%p173) target = $region12
    $region11: #{vae_encoder_block.3} parent=5 // pred_region
      %s177 = ssub.s32 %s11, 1
      // Predicated region
      $region13: #{vae_encoder_block.3} parent=11 // pred_check
        %p178 = pneg %p72
      $region14: #{vae_encoder_block.3} parent=11 // pred_check_branch
        %180 = sbr.rel (%p178) target = $region16
      $region15: #{vae_encoder_block.3} parent=11 // pred_region
        _
      $region16: #{vae_encoder_block.3} parent=11 // pred_fallthru
        _
      // Predicated region
      $region17: #{vae_encoder_block.3} parent=11 // pred_check
        %p181 = pneg %p93
      $region18: #{vae_encoder_block.3} parent=11 // pred_check_branch
        %183 = sbr.rel (%p181) target = $region20
      $region19: #{vae_encoder_block.3} parent=11 // pred_region
        _
      $region20: #{vae_encoder_block.3} parent=11 // pred_fallthru
        _
      // Predicated region
      $region21: #{vae_encoder_block.3} parent=11 // pred_check
        %p184 = pneg %p114
      $region22: #{vae_encoder_block.3} parent=11 // pred_check_branch
        %186 = sbr.rel (%p184) target = $region24
      $region23: #{vae_encoder_block.3} parent=11 // pred_region
        _
      $region24: #{vae_encoder_block.3} parent=11 // pred_fallthru
        _
      // Predicated region
      $region25: #{vae_encoder_block.3} parent=11 // pred_check
        %p187 = pneg %p135
      $region26: #{vae_encoder_block.3} parent=11 // pred_check_branch
        %189 = sbr.rel (%p187) target = $region28
      $region27: #{vae_encoder_block.3} parent=11 // pred_region
        _
      $region28: #{vae_encoder_block.3} parent=11 // pred_fallthru
        _
    $region12: #{vae_encoder_block.3} parent=5 // pred_fallthru
      _
    %p190 = scmp.lt.s32.totalorder %s11, 2
    // Predicated region
    $region29: #{vae_encoder_block.3} parent=5 // pred_check
      %p191 = pneg %p190
    $region30: #{vae_encoder_block.3} parent=5 // pred_check_branch
      %193 = sbr.rel (%p191) target = $region32
    $region31: #{vae_encoder_block.3} parent=5 // pred_region
      // Predicated region
      $region33: #{vae_encoder_block.3} parent=31 // pred_check
        %p194 = pneg %p45
      $region34: #{vae_encoder_block.3} parent=31 // pred_check_branch
        %196 = sbr.rel (%p194) target = $region36
      $region35: #{vae_encoder_block.3} parent=31 // pred_region
        %p197 = scmp.lt.s32.totalorder %s18, 1
        %s198 = scalar_select %p197, %s18, 1
        %p199 = scmp.lt.s32.totalorder %s19, 0
        %s200 = scalar_select %p199, %s19, 0
        %s201 = sadd.s32 %s200, %s198
        %s202 = smul.addr %s201, 8
        %s203 = scalar_lea.vmem %s0, %s202
      $region36: #{vae_encoder_block.3} parent=31 // pred_fallthru
        _
    $region32: #{vae_encoder_block.3} parent=5 // pred_fallthru
      _
    %p204 = scmp.le.s32.totalorder 1, %s11
    %p205 = scmp.lt.s32.totalorder %s11, 3
    %p206 = pnand %p204, %p205
    %p207 = pneg %p206
    // Predicated region
    $region37: #{vae_encoder_block.3} parent=5 // pred_check
      _
    $region38: #{vae_encoder_block.3} parent=5 // pred_check_branch
      %209 = sbr.rel (%p206) target = $region40
    $region39: #{vae_encoder_block.3} parent=5 // pred_region
      %s210 = ssub.s32 %s11, 1
      %p211 = scmp.lt.s32.totalorder %s20, 1
      %s212 = scalar_select %p211, %s20, 1
      %p213 = scmp.lt.s32.totalorder %s21, 0
      %s214 = scalar_select %p213, %s21, 0
      %s215 = sadd.s32 %s214, %s212
      %s216 = smul.addr %s215, 8
      %s217 = scalar_lea.vmem %s0, %s216
      %p218 = pneg %p51
      %p219 = pneg %p48
      %p220 = pneg %p72
      %p221 = pneg %p69
      %p222 = pneg %p93
      %p223 = pneg %p90
      %p224 = pneg %p114
      %p225 = pneg %p111
      %p226 = pneg %p135
      %p227 = pneg %p132
      %p228 = pneg %p163
      %p229 = pneg %p160
      %p230 = scmp.lt.s32.totalorder %s20, 1
      %s231 = scalar_select %p230, %s20, 1
      %p232 = scmp.lt.s32.totalorder %s21, 0
      %s233 = scalar_select %p232, %s21, 0
      %s234 = sadd.s32 %s233, %s231
      %s235 = smul.addr %s234, 8
      %s236 = scalar_lea.vmem %s5, %s235
      %p237 = scmp.lt.s32.totalorder %s20, 1
      %s238 = scalar_select %p237, %s20, 1
      %p239 = scmp.lt.s32.totalorder %s21, 0
      %s240 = scalar_select %p239, %s21, 0
      %s241 = sadd.s32 %s240, %s238
      %s242 = smul.addr %s241, 8
      %s243 = scalar_lea.vmem %s0, %s242
      %p244 = scmp.lt.s32.totalorder %s20, 1
      %s245 = scalar_select %p244, %s20, 1
      %p246 = scmp.lt.s32.totalorder %s21, 0
      %s247 = scalar_select %p246, %s21, 0
      %s248 = sadd.s32 %s247, %s245
      %s249 = smul.addr %s248, 8
      %s250 = scalar_lea.vmem %s5, %s249
      %v251 = vld [vmem:[%s1] sm:$0xff]
      %v252 = vld [vmem:[%s1 + $0x8] sm:$0xff]
      %vm253 = vcmask 7168
      %v254 = vsel %vm253, %v251, 0.0
      %v255 = vsel %vm253, %v252, 0.0
      %v256 = vadd.f32 %v254, %v255
      %v257 = vld [vmem:[%s2] sm:$0xff]
      %v258 = vld [vmem:[%s2 + $0x8] sm:$0xff]
      %v259 = vsel %vm253, %v257, 0.0
      %v260 = vsel %vm253, %v258, 0.0
      %v261 = vadd.f32 %v259, %v260
      %v262 = vmul.f32 %v256, 0.0078125
      %v263 = vmul.f32 %v261, 0.0078125
      %v264 = vmul.f32 %v262, %v262
      %v265 = vsub.f32 %v263, %v264
      %v266 = vld [vmem:[%s3] sm:$0xff]
      %v267 = vadd.f32 %v265, 1e-05
      %v268 = vrsqrt.pop %v267
      %v269 = vmul.f32 %v266, %v268
      %v270 = vld [vmem:[%s4] sm:$0xff]
      %v271 = vmul.f32 %v262, %v269
      %v272 = vsub.f32 %v270, %v271
      %v273 = vld [vmem:[%s243] sm:$0xff]
      %275 = vset.pattern.permute.xlu0 0
      %276 = vperm.xlu0 %275, %v269
      %v277 = vpop.permute.xlu0 %276
      %v279 = vmul.f32 %v273, %v277
      %281 = vset.pattern.permute.xlu0 0
      %282 = vperm.xlu0 %281, %v272
      %v283 = vpop.permute.xlu0 %282
      %v285 = vadd.f32 %v279, %v283
      %vm286 = vcmp.ge.f32.partialorder %v285, 0.0
      %v287 = vmul.f32 %v285, 0.2
      %v288 = vsel %vm286, %v285, %v287
      %vm289 = vcmask 523264
      %290 = vst.msk [vmem:[%s250] sm:$0xff] %vm289, %v288
      %p291 = scmp.lt.s32.totalorder %s20, 1
      %s292 = scalar_select %p291, %s20, 1
      %p293 = scmp.lt.s32.totalorder %s21, 0
      %s294 = scalar_select %p293, %s21, 0
      %s295 = sadd.s32 %s294, %s292
      %s296 = smul.addr %s295, 8
      %s297 = scalar_lea.vmem %s5, %s296
      // Predicated region
      $region41: #{vae_encoder_block.3} parent=39 // pred_check
        %p298 = pneg %p160
      $region42: #{vae_encoder_block.3} parent=39 // pred_check_branch
        %300 = sbr.rel (%p298) target = $region44
      $region43: #{vae_encoder_block.3} parent=39 // pred_region
        _
      $region44: #{vae_encoder_block.3} parent=39 // pred_fallthru
        _
    $region40: #{vae_encoder_block.3} parent=5 // pred_fallthru
      _
    %p301 = scmp.le.s32.totalorder 2, %s11
    // Predicated region
    $region45: #{vae_encoder_block.3} parent=5 // pred_check
      %p302 = pneg %p301
    $region46: #{vae_encoder_block.3} parent=5 // pred_check_branch
      %304 = sbr.rel (%p302) target = $region48
    $region47: #{vae_encoder_block.3} parent=5 // pred_region
      %s305 = ssub.s32 %s11, 2
      // Predicated region
      $region49: #{vae_encoder_block.3} parent=47 // pred_check
        %p306 = pneg %p166
      $region50: #{vae_encoder_block.3} parent=47 // pred_check_branch
        %308 = sbr.rel (%p306) target = $region52
      $region51: #{vae_encoder_block.3} parent=47 // pred_region
        %p309 = scmp.lt.s32.totalorder %s22, 1
        %s310 = scalar_select %p309, %s22, 1
        %p311 = scmp.lt.s32.totalorder %s23, 0
        %s312 = scalar_select %p311, %s23, 0
        %s313 = sadd.s32 %s312, %s310
        %s314 = smul.addr %s313, 8
        %s315 = scalar_lea.vmem %s5, %s314
      $region52: #{vae_encoder_block.3} parent=47 // pred_fallthru
        _
    $region48: #{vae_encoder_block.3} parent=5 // pred_fallthru
      _
  $region6: #{vae_encoder_block.3} parent=0 // loop_footer
    %s15 = sadd.s32 1, %s11
  $region7: #{vae_encoder_block.3} parent=0 // loop_footer_branch
    %10 = sbr.rel target = $region3
  $region8: #{vae_encoder_block.3} parent=0 // loop_exit
    _

// kernel: vae_encoder_block.2
$region0: #{vae_encoder_block.2}
  #allocation0 [shape = 'u32[]', space=smem, size = 0x4, offset = 0x4, fixed_abs, tag = 'smem constant byte address 0x4 - core index']
  #allocation1 [shape = 'u32[144,128]{1,0:T(1,128)}', space=vmem, size = 0x12000, scoped, tag = 'internal scratch']
  %s0 = inlined_call_operand.vmem [shape: f32[2,36,64], index: 0, kind: input, shape index: {}]
  %s1 = inlined_call_operand.vmem [shape: f32[8,36], index: 1, kind: input, shape index: {}]
  %s2 = inlined_call_operand.vmem [shape: f32[8,1], index: 2, kind: input, shape index: {}]
  %s3 = inlined_call_operand.vmem [shape: f32[2,8,64], index: 3, kind: output, shape index: {0}]
  %s4 = inlined_call_operand.vmem [shape: f32[2,8,1], index: 4, kind: output, shape index: {1}]
  %s5 = inlined_call_operand.vmem [shape: f32[2,8,1], index: 5, kind: output, shape index: {2}]
  %6 = xla_tuple %s3, %s4, %s5
  %s7 = sld [smem:[#allocation0]]
  $region65: #{vae_encoder_block.2} parent=0
    _
  %s9 = ssub.s32 1, %s7
  %s10 = scalar_select 0, %s9, %s7
  loop: start=0, step=1, limit=4
  $region2: #{vae_encoder_block.2} parent=0 // loop_pre_header
    _
  $region3: #{vae_encoder_block.2} parent=0 // loop_header
    %s12 = sphi 0, %s16
    %p13 = scmp.ge.s32.totalorder %s12, 4
    %s19 = sphi 0, %s31
    %s20 = sphi 0, %s27
    %s21 = sphi 0, %s19
    %s22 = sphi 0, %s20
    %s23 = sphi 0, %s21
    %s24 = sphi 0, %s22
    %s36 = sphi 0, %s38
    %s39 = sphi 0, %s36
    %s40 = sphi 0, %s39
    %s56 = sphi 0, %s40
    %s60 = sphi 0, %s60
    %s62 = sphi 0, %s60
    %s63 = sphi 0, %s62
    %s77 = sphi 0, %s63
    %s81 = sphi 0, %s81
    %s83 = sphi 0, %s81
    %s84 = sphi 0, %s83
    %s98 = sphi 0, %s84
    %s106 = sphi 0, %s108
    %s109 = sphi 0, %s106
    %s110 = sphi 0, %s109
    %s126 = sphi 0, %s110
    %s132 = sphi 0, %s134
    %s135 = sphi 0, %s132
    %s136 = sphi 0, %s135
    %s152 = sphi 0, %s136
    %s158 = sphi 0, %s160
    %s161 = sphi 0, %s158
    %s162 = sphi 0, %s161
    %s178 = sphi 0, %s162
  $region4: #{vae_encoder_block.2} parent=0 // loop_header_branch
    %15 = sbr.rel (%p13) target = $region8
  $region5: #{vae_encoder_block.2} parent=0 // loop_body
    %s17 = ssub.s32 %s12, 1
    %s18 = ssub.s32 %s12, 2
    %s25 = sadd.s32 1, %s20
    %p26 = scmp.ge.s32.totalorder %s25, 1
    %s27 = scalar_select %p26, 0, %s25
    %s28 = sadd.s32 1, %s19
    %s29 = scalar_select %p26, %s28, %s19
    %p30 = scmp.ge.s32.totalorder %s29, 2
    %s31 = scalar_select %p30, 0, %s29
    %s32 = ssub.s32 %s19, %s31
    %s33 = ssub.s32 %s20, %s27
    %s34 = sor.u32 %s32, %s33
    %p35 = scmp.eq.s32.totalorder %s34, 0
    %s37 = sadd.s32 %s36, 1
    %s38 = scalar_select %p35, %s36, %s37
    %p41 = pneg %p35
    %p42 = scmp.eq.s32.totalorder %s12, 1
    %p43 = por %p41, %p42
    %p44 = scmp.ne.s32.totalorder %s36, %s39
    %p45 = scmp.eq.s32.totalorder %s12, 0
    %p46 = por %p44, %p45
    %p47 = scmp.ne.s32.totalorder %s36, %s39
    %p48 = scmp.eq.s32.totalorder %s17, 1
    %p49 = por %p47, %p48
    %p50 = scmp.ne.s32.totalorder %s39, %s40
    %p51 = scmp.eq.s32.totalorder %s17, 0
    %p52 = por %p50, %p51
    %p53 = scmp.ne.s32.totalorder %s39, %s40
    %p54 = scmp.eq.s32.totalorder %s18, 1
    %p55 = por %p53, %p54
    %p57 = scmp.ne.s32.totalorder %s40, %s56
    %p58 = scmp.eq.s32.totalorder %s18, 0
    %p59 = por %p57, %p58
    %s61 = sadd.s32 %s60, 1
    %p64 = scmp.eq.s32.totalorder %s12, 1
    %p65 = scmp.ne.s32.totalorder %s60, %s62
    %p66 = scmp.eq.s32.totalorder %s12, 0
    %p67 = por %p65, %p66
    %p68 = scmp.ne.s32.totalorder %s60, %s62
    %p69 = scmp.eq.s32.totalorder %s17, 1
    %p70 = por %p68, %p69
    %p71 = scmp.ne.s32.totalorder %s62, %s63
    %p72 = scmp.eq.s32.totalorder %s17, 0
    %p73 = por %p71, %p72
    %p74 = scmp.ne.s32.totalorder %s62, %s63
    %p75 = scmp.eq.s32.totalorder %s18, 1
    %p76 = por %p74, %p75
    %p78 = scmp.ne.s32.totalorder %s63, %s77
    %p79 = scmp.eq.s32.totalorder %s18, 0
    %p80 = por %p78, %p79
    %s82 = sadd.s32 %s81, 1
    %p85 = scmp.eq.s32.totalorder %s12, 1
    %p86 = scmp.ne.s32.totalorder %s81, %s83
    %p87 = scmp.eq.s32.totalorder %s12, 0
    %p88 = por %p86, %p87
    %p89 = scmp.ne.s32.totalorder %s81, %s83
    %p90 = scmp.eq.s32.totalorder %s17, 1
    %p91 = por %p89, %p90
    %p92 = scmp.ne.s32.totalorder %s83, %s84
    %p93 = scmp.eq.s32.totalorder %s17, 0
    %p94 = por %p92, %p93
    %p95 = scmp.ne.s32.totalorder %s83, %s84
    %p96 = scmp.eq.s32.totalorder %s18, 1
    %p97 = por %p95, %p96
    %p99 = scmp.ne.s32.totalorder %s84, %s98
    %p100 = scmp.eq.s32.totalorder %s18, 0
    %p101 = por %p99, %p100
    %s102 = ssub.s32 %s19, %s31
    %s103 = ssub.s32 %s20, %s27
    %s104 = sor.u32 %s102, %s103
    %p105 = scmp.eq.s32.totalorder %s104, 0
    %s107 = sadd.s32 %s106, 1
    %s108 = scalar_select %p105, %s106, %s107
    %p111 = pneg %p105
    %p112 = scmp.eq.s32.totalorder %s12, 1
    %p113 = por %p111, %p112
    %p114 = scmp.ne.s32.totalorder %s106, %s109
    %p115 = scmp.eq.s32.totalorder %s12, 0
    %p116 = por %p114, %p115
    %p117 = scmp.ne.s32.totalorder %s106, %s109
    %p118 = scmp.eq.s32.totalorder %s17, 1
    %p119 = por %p117, %p118
    %p120 = scmp.ne.s32.totalorder %s109, %s110
    %p121 = scmp.eq.s32.totalorder %s17, 0
    %p122 = por %p120, %p121
    %p123 = scmp.ne.s32.totalorder %s109, %s110
    %p124 = scmp.eq.s32.totalorder %s18, 1
    %p125 = por %p123, %p124
    %p127 = scmp.ne.s32.totalorder %s110, %s126
    %p128 = scmp.eq.s32.totalorder %s18, 0
    %p129 = por %p127, %p128
    %s130 = ssub.s32 %s19, %s31
    %p131 = scmp.eq.s32.totalorder %s130, 0
    %s133 = sadd.s32 %s132, 1
    %s134 = scalar_select %p131, %s132, %s133
    %p137 = pneg %p131
    %p138 = scmp.eq.s32.totalorder %s12, 1
    %p139 = por %p137, %p138
    %p140 = scmp.ne.s32.totalorder %s132, %s135
    %p141 = scmp.eq.s32.totalorder %s12, 0
    %p142 = por %p140, %p141
    %p143 = scmp.ne.s32.totalorder %s132, %s135
    %p144 = scmp.eq.s32.totalorder %s17, 1
    %p145 = por %p143, %p144
    %p146 = scmp.ne.s32.totalorder %s135, %s136
    %p147 = scmp.eq.s32.totalorder %s17, 0
    %p148 = por %p146, %p147
    %p149 = scmp.ne.s32.totalorder %s135, %s136
    %p150 = scmp.eq.s32.totalorder %s18, 1
    %p151 = por %p149, %p150
    %p153 = scmp.ne.s32.totalorder %s136, %s152
    %p154 = scmp.eq.s32.totalorder %s18, 0
    %p155 = por %p153, %p154
    %s156 = ssub.s32 %s19, %s31
    %p157 = scmp.eq.s32.totalorder %s156, 0
    %s159 = sadd.s32 %s158, 1
    %s160 = scalar_select %p157, %s158, %s159
    %p163 = pneg %p157
    %p164 = scmp.eq.s32.totalorder %s12, 1
    %p165 = por %p163, %p164
    %p166 = scmp.ne.s32.totalorder %s158, %s161
    %p167 = scmp.eq.s32.totalorder %s12, 0
    %p168 = por %p166, %p167
    %p169 = scmp.ne.s32.totalorder %s158, %s161
    %p170 = scmp.eq.s32.totalorder %s17, 1
    %p171 = por %p169, %p170
    %p172 = scmp.ne.s32.totalorder %s161, %s162
    %p173 = scmp.eq.s32.totalorder %s17, 0
    %p174 = por %p172, %p173
    %p175 = scmp.ne.s32.totalorder %s161, %s162
    %p176 = scmp.eq.s32.totalorder %s18, 1
    %p177 = por %p175, %p176
    %p179 = scmp.ne.s32.totalorder %s162, %s178
    %p180 = scmp.eq.s32.totalorder %s18, 0
    %p181 = por %p179, %p180
    %p182 = scmp.le.s32.totalorder 1, %s12
    %p183 = scmp.lt.s32.totalorder %s12, 3
    %p184 = pnand %p182, %p183
    %p185 = pneg %p184
    // Predicated region
    $region9: #{vae_encoder_block.2} parent=5 // pred_check
      _
    $region10: #{vae_encoder_block.2} parent=5 // pred_check_branch
      %187 = sbr.rel (%p184) target = $region12
    $region11: #{vae_encoder_block.2} parent=5 // pred_region
      %s188 = ssub.s32 %s12, 1
      // Predicated region
      $region13: #{vae_encoder_block.2} parent=11 // pred_check
        %p189 = pneg %p73
      $region14: #{vae_encoder_block.2} parent=11 // pred_check_branch
        %191 = sbr.rel (%p189) target = $region16
      $region15: #{vae_encoder_block.2} parent=11 // pred_region
        _
      $region16: #{vae_encoder_block.2} parent=11 // pred_fallthru
        _
      // Predicated region
      $region17: #{vae_encoder_block.2} parent=11 // pred_check
        %p192 = pneg %p94
      $region18: #{vae_encoder_block.2} parent=11 // pred_check_branch
        %194 = sbr.rel (%p192) target = $region20
      $region19: #{vae_encoder_block.2} parent=11 // pred_region
        _
      $region20: #{vae_encoder_block.2} parent=11 // pred_fallthru
        _
    $region12: #{vae_encoder_block.2} parent=5 // pred_fallthru
      _
    %p195 = scmp.lt.s32.totalorder %s12, 2
    // Predicated region
    $region21: #{vae_encoder_block.2} parent=5 // pred_check
      %p196 = pneg %p195
    $region22: #{vae_encoder_block.2} parent=5 // pred_check_branch
      %198 = sbr.rel (%p196) target = $region24
    $region23: #{vae_encoder_block.2} parent=5 // pred_region
      // Predicated region
      $region25: #{vae_encoder_block.2} parent=23 // pred_check
        %p199 = pneg %p46
      $region26: #{vae_encoder_block.2} parent=23 // pred_check_branch
        %201 = sbr.rel (%p199) target = $region28
      $region27: #{vae_encoder_block.2} parent=23 // pred_region
        %p202 = scmp.lt.s32.totalorder %s19, 1
        %s203 = scalar_select %p202, %s19, 1
        %p204 = scmp.lt.s32.totalorder %s20, 0
        %s205 = scalar_select %p204, %s20, 0
        %s206 = smul.addr %s203, 5
        %s207 = sadd.s32 %s205, %s206
        %s208 = smul.addr %s207, 8
        %s209 = scalar_lea.vmem %s0, %s208
      $region28: #{vae_encoder_block.2} parent=23 // pred_fallthru
        _
    $region24: #{vae_encoder_block.2} parent=5 // pred_fallthru
      _
    %p210 = scmp.le.s32.totalorder 1, %s12
    %p211 = scmp.lt.s32.totalorder %s12, 3
    %p212 = pnand %p210, %p211
    %p213 = pneg %p212
    // Predicated region
    $region29: #{vae_encoder_block.2} parent=5 // pred_check
      _
    $region30: #{vae_encoder_block.2} parent=5 // pred_check_branch
      %215 = sbr.rel (%p212) target = $region32
    $region31: #{vae_encoder_block.2} parent=5 // pred_region
      %s216 = ssub.s32 %s12, 1
      %p217 = scmp.lt.s32.totalorder %s21, 1
      %s218 = scalar_select %p217, %s21, 1
      %p219 = scmp.lt.s32.totalorder %s22, 0
      %s220 = scalar_select %p219, %s22, 0
      %s221 = smul.addr %s218, 5
      %s222 = sadd.s32 %s220, %s221
      %s223 = smul.addr %s222, 8
      %s224 = scalar_lea.vmem %s0, %s223
      %p225 = pneg %p52
      %p226 = pneg %p49
      %p227 = pneg %p73
      %p228 = pneg %p70
      %p229 = pneg %p94
      %p230 = pneg %p91
      %p231 = pneg %p122
      %p232 = pneg %p119
      %p233 = scmp.lt.s32.totalorder %s21, 1
      %s234 = scalar_select %p233, %s21, 1
      %p235 = scmp.lt.s32.totalorder %s22, 0
      %s236 = scalar_select %p235, %s22, 0
      %s237 = sadd.s32 %s236, %s234
      %s238 = smul.addr %s237, 8
      %s239 = scalar_lea.vmem %s3, %s238
      %p240 = pneg %p148
      %p241 = pneg %p145
      %p242 = scmp.lt.s32.totalorder %s21, 1
      %s243 = scalar_select %p242, %s21, 1
      %s244 = smul.addr %s243, 8
      %s245 = scalar_lea.vmem %s4, %s244
      %p246 = pneg %p174
      %p247 = pneg %p171
      %p248 = scmp.lt.s32.totalorder %s21, 1
      %s249 = scalar_select %p248, %s21, 1
      %s250 = smul.addr %s249, 8
      %s251 = scalar_lea.vmem %s5, %s250
      %p252 = scmp.lt.s32.totalorder %s21, 1
      %s253 = scalar_select %p252, %s21, 1
      %p254 = scmp.lt.s32.totalorder %s22, 0
      %s255 = scalar_select %p254, %s22, 0
      %s256 = smul.addr %s253, 5
      %s257 = sadd.s32 %s255, %s256
      %s258 = smul.addr %s257, 8
      %s259 = scalar_lea.vmem %s0, %s258
      %p260 = scmp.lt.s32.totalorder %s21, 1
      %s261 = scalar_select %p260, %s21, 1
      %p262 = scmp.lt.s32.totalorder %s22, 0
      %s263 = scalar_select %p262, %s22, 0
      %s264 = sadd.s32 %s263, %s261
      %s265 = smul.addr %s264, 8
      %s266 = scalar_lea.vmem %s3, %s265
      %p267 = scmp.lt.s32.totalorder %s21, 1
      %s268 = scalar_select %p267, %s21, 1
      %s269 = smul.addr %s268, 8
      %s270 = scalar_lea.vmem %s4, %s269
      %p271 = scmp.lt.s32.totalorder %s21, 1
      %s272 = scalar_select %p271, %s21, 1
      %s273 = smul.addr %s272, 8
      %s274 = scalar_lea.vmem %s5, %s273
      %v275 = vld [vmem:[%s1] sm:$0xff]
      %v276 = vld [vmem:[%s259] sm:$0xff]
      %v277 = vld [vmem:[%s259 + $0x8] sm:$0xff]
      %v278 = vld [vmem:[%s259 + $0x10] sm:$0xff]
      %v279 = vld [vmem:[%s259 + $0x18] sm:$0xff]
      %v280 = vld [vmem:[%s259 + $0x20] sm:$0xf]
      %v281 = vld [vmem:[%s2] sm:$0xff]
      %283 = vset.pattern.permute.xlu0 0
      %284 = vperm.xlu0 %283, %v281
      %v285 = vpop.permute.xlu0 %284
      %vm287 = vcmask 293888
      %v289 = vsel %vm287, %v275, 0
      %vm291 = vcmask 1043456
      %v293 = vsel %vm291, %v280, 0
      %295 = vmatprep.subr.mxu0 0.0
      %296 = vmatpush1.msra.mxu0 0.0
      %297 = vmatprep.subr.mxu0 0.0
      %298 = vmatpush1.msra.mxu0 0.0
      %299 = vmatprep.subr.mxu0 0.0
      %300 = vmatpush1.msra.mxu0 0.0
      %301 = vmatprep.subr.mxu0 0.0
      %302 = vmatpush1.msra.mxu0 0.0
      %303 = vmatprep.subr.mxu0 0.0
      %304 = vmatpush1.msra.mxu0 0.0
      %305 = vmatprep.subr.mxu0 0.0
      %306 = vmatpush1.msra.mxu0 0.0
      %307 = vmatprep.subr.mxu0 0.0
      %308 = vmatpush1.msra.mxu0 0.0
      %309 = vmatprep.subr.mxu0 0.0
      %310 = vmatpush1.msra.mxu0 0.0
      %311 = vmatprep.subr.mxu0 0.0
      %312 = vmatpush1.msra.mxu0 0.0
      %313 = vmatprep.subr.mxu0 0.0
      %314 = vmatpush1.msra.mxu0 0.0
      %315 = vmatprep.subr.mxu0 0.0
      %316 = vmatpush1.msra.mxu0 0.0
      %317 = vmatprep.subr.mxu0 0.0
      %318 = vmatpush1.msra.mxu0 %v293
      %319 = vmatprep.subr.mxu0 0.0
      %320 = vmatpush1.msra.mxu0 %v279
      %321 = vmatprep.subr.mxu0 0.0
      %322 = vmatpush1.msra.mxu0 %v278
      %323 = vmatprep.subr.mxu0 0.0
      %324 = vmatpush1.msra.mxu0 %v277
      %325 = vmatprep.subr.mxu0 0.0
      %326 = vmatpush1.msra.mxu0 %v276
      %327 = vmatprep.subr.mxu0 0.0
      %328 = vmatpush2.msra.mxu0 0.0
      %329 = vmatprep.subr.mxu0 0.0
      %330 = vmatpush2.msra.mxu0 0.0
      %331 = vmatprep.subr.mxu0 0.0
      %332 = vmatpush2.msra.mxu0 0.0
      %333 = vmatprep.subr.mxu0 0.0
      %334 = vmatpush2.msra.mxu0 0.0
      %335 = vmatprep.subr.mxu0 0.0
      %336 = vmatpush2.msra.mxu0 0.0
      %337 = vmatprep.subr.mxu0 0.0
      %338 = vmatpush2.msra.mxu0 0.0
      %339 = vmatprep.subr.mxu0 0.0
      %340 = vmatpush2.msra.mxu0 0.0
      %341 = vmatprep.subr.mxu0 0.0
      %342 = vmatpush2.msra.mxu0 0.0
      %343 = vmatprep.subr.mxu0 0.0
      %344 = vmatpush2.msra.mxu0 0.0
      %345 = vmatprep.subr.mxu0 0.0
      %346 = vmatpush2.msra.mxu0 0.0
      %347 = vmatprep.subr.mxu0 0.0
      %348 = vmatpush2.msra.mxu0 0.0
      %349 = vmatprep.subr.mxu0 0.0
      %350 = vmatpush2.msra.mxu0 0.0
      %351 = vmatprep.subr.mxu0 0.0
      %352 = vmatpush2.msra.mxu0 0.0
      %353 = vmatprep.subr.mxu0 0.0
      %354 = vmatpush2.msra.mxu0 0.0
      %355 = vmatprep.subr.mxu0 0.0
      %356 = vmatpush2.msra.mxu0 0.0
      %357 = vmatprep.subr.mxu0 0.0
      %358 = vmatpush2.msra.mxu0 0.0
      %359 = vmatprep.mubr.f32.mxu0 0.0
      %360 = vmatmul.mubr.f32.gmra.mxu0 %v289
      %v361 = vpop.f32.mrf.mxu0
      %v362 = vadd.f32 %v285, %v361
      %v363 = vpop.f32.mrf.mxu0
      %364 = vdwg.mxu0
      %vm365 = vcmask 523264
      %366 = vst.msk [vmem:[%s266] sm:$0xff] %vm365, %v362
      %p367 = scmp.eq.s32.totalorder %s22, 0
      // Predicated region
      $region33: #{vae_encoder_block.2} parent=31 // pred_check
        %p368 = pneg %p367
      $region34: #{vae_encoder_block.2} parent=31 // pred_check_branch
        %370 = sbr.rel (%p368) target = $region36
      $region35: #{vae_encoder_block.2} parent=31 // pred_region
        %vm371 = vcmask 7168
        %372 = vst.msk [vmem:[%s270] sm:$0xff] %vm371, 0.0
        %373 = vst.msk [vmem:[%s274] sm:$0xff] %vm371, 0.0
      $region36: #{vae_encoder_block.2} parent=31 // pred_fallthru
        _
      %v374 = vld [vmem:[%s270] sm:$0xff]
      %v376 = vsel %vm365, %v362, 0
      %378 = vmatprep.subr.mxu0 0.0
      %379 = vmatpush1.msra.mxu0 0.0
      %380 = vmatprep.subr.mxu0 0.0
      %381 = vmatpush1.msra.mxu0 0.0
      %382 = vmatprep.subr.mxu0 0.0
      %383 = vmatpush1.msra.mxu0 0.0
      %384 = vmatprep.subr.mxu0 0.0
      %385 = vmatpush1.msra.mxu0 0.0
      %386 = vmatprep.subr.mxu0 0.0
      %387 = vmatpush1.msra.mxu0 0.0
      %388 = vmatprep.subr.mxu0 0.0
      %389 = vmatpush1.msra.mxu0 0.0
      %390 = vmatprep.subr.mxu0 0.0
      %391 = vmatpush1.msra.mxu0 0.0
      %392 = vmatprep.subr.mxu0 0.0
      %393 = vmatpush1.msra.mxu0 0.0
      %394 = vmatprep.subr.mxu0 0.0
      %395 = vmatpush1.msra.mxu0 1.0
      %396 = vmatprep.subr.mxu0 0.0
      %397 = vmatpush1.msra.mxu0 1.0
      %398 = vmatprep.subr.mxu0 0.0
      %399 = vmatpush1.msra.mxu0 1.0
      %400 = vmatprep.subr.mxu0 0.0
      %401 = vmatpush1.msra.mxu0 1.0
      %402 = vmatprep.subr.mxu0 0.0
      %403 = vmatpush1.msra.mxu0 1.0
      %404 = vmatprep.subr.mxu0 0.0
      %405 = vmatpush1.msra.mxu0 1.0
      %406 = vmatprep.subr.mxu0 0.0
      %407 = vmatpush1.msra.mxu0 1.0
      %408 = vmatprep.subr.mxu0 0.0
      %409 = vmatpush1.msra.mxu0 1.0
      %410 = vmatprep.subr.mxu0 0.0
      %411 = vmatpush2.msra.mxu0 0.0
      %412 = vmatprep.subr.mxu0 0.0
      %413 = vmatpush2.msra.mxu0 0.0
      %414 = vmatprep.subr.mxu0 0.0
      %415 = vmatpush2.msra.mxu0 0.0
      %416 = vmatprep.subr.mxu0 0.0
      %417 = vmatpush2.msra.mxu0 0.0
      %418 = vmatprep.subr.mxu0 0.0
      %419 = vmatpush2.msra.mxu0 0.0
      %420 = vmatprep.subr.mxu0 0.0
      %421 = vmatpush2.msra.mxu0 0.0
      %422 = vmatprep.subr.mxu0 0.0
      %423 = vmatpush2.msra.mxu0 0.0
      %424 = vmatprep.subr.mxu0 0.0
      %425 = vmatpush2.msra.mxu0 0.0
      %426 = vmatprep.subr.mxu0 0.0
      %427 = vmatpush2.msra.mxu0 0.0
      %428 = vmatprep.subr.mxu0 0.0
      %429 = vmatpush2.msra.mxu0 0.0
      %430 = vmatprep.subr.mxu0 0.0
      %431 = vmatpush2.msra.mxu0 0.0
      %432 = vmatprep.subr.mxu0 0.0
      %433 = vmatpush2.msra.mxu0 0.0
      %434 = vmatprep.subr.mxu0 0.0
      %435 = vmatpush2.msra.mxu0 0.0
      %436 = vmatprep.subr.mxu0 0.0
      %437 = vmatpush2.msra.mxu0 0.0
      %438 = vmatprep.subr.mxu0 0.0
      %439 = vmatpush2.msra.mxu0 0.0
      %440 = vmatprep.subr.mxu0 0.0
      %441 = vmatpush2.msra.mxu0 0.0
      %442 = vmatprep.mubr.f32.mxu0 0.0
      %443 = vmatmul.mubr.f32.gmra.mxu0 %v376
      %v444 = vpop.f32.mrf.mxu0
      %v445 = vadd.f32 0.0, %v444
      %v446 = vpop.f32.mrf.mxu0
      %447 = vdwg.mxu0
      %v448 = vadd.f32 %v374, %v445
      %vm449 = vcmask 7168
      %450 = vst.msk [vmem:[%s270] sm:$0xff] %vm449, %v448
      %v451 = vld [vmem:[%s274] sm:$0xff]
      %v452 = vmul.f32 %v362, %v362
      %v454 = vsel %vm365, %v452, 0
      %456 = vmatprep.subr.mxu0 0.0
      %457 = vmatpush1.msra.mxu0 0.0
      %458 = vmatprep.subr.mxu0 0.0
      %459 = vmatpush1.msra.mxu0 0.0
      %460 = vmatprep.subr.mxu0 0.0
      %461 = vmatpush1.msra.mxu0 0.0
      %462 = vmatprep.subr.mxu0 0.0
      %463 = vmatpush1.msra.mxu0 0.0
      %464 = vmatprep.subr.mxu0 0.0
      %465 = vmatpush1.msra.mxu0 0.0
      %466 = vmatprep.subr.mxu0 0.0
      %467 = vmatpush1.msra.mxu0 0.0
      %468 = vmatprep.subr.mxu0 0.0
      %469 = vmatpush1.msra.mxu0 0.0
      %470 = vmatprep.subr.mxu0 0.0
      %471 = vmatpush1.msra.mxu0 0.0
      %472 = vmatprep.subr.mxu0 0.0
      %473 = vmatpush1.msra.mxu0 1.0
      %474 = vmatprep.subr.mxu0 0.0
      %475 = vmatpush1.msra.mxu0 1.0
      %476 = vmatprep.subr.mxu0 0.0
      %477 = vmatpush1.msra.mxu0 1.0
      %478 = vmatprep.subr.mxu0 0.0
      %479 = vmatpush1.msra.mxu0 1.0
      %480 = vmatprep.subr.mxu0 0.0
      %481 = vmatpush1.msra.mxu0 1.0
      %482 = vmatprep.subr.mxu0 0.0
      %483 = vmatpush1.msra.mxu0 1.0
      %484 = vmatprep.subr.mxu0 0.0
      %485 = vmatpush1.msra.mxu0 1.0
      %486 = vmatprep.subr.mxu0 0.0
      %487 = vmatpush1.msra.mxu0 1.0
      %488 = vmatprep.subr.mxu0 0.0
      %489 = vmatpush2.msra.mxu0 0.0
      %490 = vmatprep.subr.mxu0 0.0
      %491 = vmatpush2.msra.mxu0 0.0
      %492 = vmatprep.subr.mxu0 0.0
      %493 = vmatpush2.msra.mxu0 0.0
      %494 = vmatprep.subr.mxu0 0.0
      %495 = vmatpush2.msra.mxu0 0.0
      %496 = vmatprep.subr.mxu0 0.0
      %497 = vmatpush2.msra.mxu0 0.0
      %498 = vmatprep.subr.mxu0 0.0
      %499 = vmatpush2.msra.mxu0 0.0
      %500 = vmatprep.subr.mxu0 0.0
      %501 = vmatpush2.msra.mxu0 0.0
      %502 = vmatprep.subr.mxu0 0.0
      %503 = vmatpush2.msra.mxu0 0.0
      %504 = vmatprep.subr.mxu0 0.0
      %505 = vmatpush2.msra.mxu0 0.0
      %506 = vmatprep.subr.mxu0 0.0
      %507 = vmatpush2.msra.mxu0 0.0
      %508 = vmatprep.subr.mxu0 0.0
      %509 = vmatpush2.msra.mxu0 0.0
      %510 = vmatprep.subr.mxu0 0.0
      %511 = vmatpush2.msra.mxu0 0.0
      %512 = vmatprep.subr.mxu0 0.0
      %513 = vmatpush2.msra.mxu0 0.0
      %514 = vmatprep.subr.mxu0 0.0
      %515 = vmatpush2.msra.mxu0 0.0
      %516 = vmatprep.subr.mxu0 0.0
      %517 = vmatpush2.msra.mxu0 0.0
      %518 = vmatprep.subr.mxu0 0.0
      %519 = vmatpush2.msra.mxu0 0.0
      %520 = vmatprep.mubr.f32.mxu0 0.0
      %521 = vmatmul.mubr.f32.gmra.mxu0 %v454
      %v522 = vpop.f32.mrf.mxu0
      %v523 = vadd.f32 0.0, %v522
      %v524 = vpop.f32.mrf.mxu0
      %525 = vdwg.mxu0
      %v526 = vadd.f32 %v451, %v523
      %527 = vst.msk [vmem:[%s274] sm:$0xff] %vm449, %v526
      %p528 = scmp.lt.s32.totalorder %s21, 1
      %s529 = scalar_select %p528, %s21, 1
      %p530 = scmp.lt.s32.totalorder %s22, 0
      %s531 = scalar_select %p530, %s22, 0
      %s532 = sadd.s32 %s531, %s529
      %s533 = smul.addr %s532, 8
      %s534 = scalar_lea.vmem %s3, %s533
      %p535 = scmp.lt.s32.totalorder %s21, 1
      %s536 = scalar_select %p535, %s21, 1
      %s537 = smul.addr %s536, 8
      %s538 = scalar_lea.vmem %s4, %s537
      %p539 = scmp.lt.s32.totalorder %s21, 1
      %s540 = scalar_select %p539, %s21, 1
      %s541 = smul.addr %s540, 8
      %s542 = scalar_lea.vmem %s5, %s541
      // Predicated region
      $region37: #{vae_encoder_block.2} parent=31 // pred_check
        %p543 = pneg %p119
      $region38: #{vae_encoder_block.2} parent=31 // pred_check_branch
        %545 = sbr.rel (%p543) target = $region40
      $region39: #{vae_encoder_block.2} parent=31 // pred_region
        _
      $region40: #{vae_encoder_block.2} parent=31 // pred_fallthru
        _
      // Predicated region
      $region41: #{vae_encoder_block.2} parent=31 // pred_check
        %p546 = pneg %p145
      $region42: #{vae_encoder_block.2} parent=31 // pred_check_branch
        %548 = sbr.rel (%p546) target = $region44
      $region43: #{vae_encoder_block.2} parent=31 // pred_region
        _
      $region44: #{vae_encoder_block.2} parent=31 // pred_fallthru
        _
      // Predicated region
      $region45: #{vae_encoder_block.2} parent=31 // pred_check
        %p549 = pneg %p171
      $region46: #{vae_encoder_block.2} parent=31 // pred_check_branch
        %551 = sbr.rel (%p549) target = $region48
      $region47: #{vae_encoder_block.2} parent=31 // pred_region
        _
      $region48: #{vae_encoder_block.2} parent=31 // pred_fallthru
        _
    $region32: #{vae_encoder_block.2} parent=5 // pred_fallthru
      _
    %p552 = scmp.le.s32.totalorder 2, %s12
    // Predicated region
    $region49: #{vae_encoder_block.2} parent=5 // pred_check
      %p553 = pneg %p552
    $region50: #{vae_encoder_block.2} parent=5 // pred_check_branch
      %555 = sbr.rel (%p553) target = $region52
    $region51: #{vae_encoder_block.2} parent=5 // pred_region
      %s556 = ssub.s32 %s12, 2
      // Predicated region
      $region53: #{vae_encoder_block.2} parent=51 // pred_check
        %p557 = pneg %p125
      $region54: #{vae_encoder_block.2} parent=51 // pred_check_branch
        %559 = sbr.rel (%p557) target = $region56
      $region55: #{vae_encoder_block.2} parent=51 // pred_region
        %p560 = scmp.lt.s32.totalorder %s23, 1
        %s561 = scalar_select %p560, %s23, 1
        %p562 = scmp.lt.s32.totalorder %s24, 0
        %s563 = scalar_select %p562, %s24, 0
        %s564 = sadd.s32 %s563, %s561
        %s565 = smul.addr %s564, 8
        %s566 = scalar_lea.vmem %s3, %s565
      $region56: #{vae_encoder_block.2} parent=51 // pred_fallthru
        _
      // Predicated region
      $region57: #{vae_encoder_block.2} parent=51 // pred_check
        %p567 = pneg %p151
      $region58: #{vae_encoder_block.2} parent=51 // pred_check_branch
        %569 = sbr.rel (%p567) target = $region60
      $region59: #{vae_encoder_block.2} parent=51 // pred_region
        %p570 = scmp.lt.s32.totalorder %s23, 1
        %s571 = scalar_select %p570, %s23, 1
        %s572 = smul.addr %s571, 8
        %s573 = scalar_lea.vmem %s4, %s572
      $region60: #{vae_encoder_block.2} parent=51 // pred_fallthru
        _
      // Predicated region
      $region61: #{vae_encoder_block.2} parent=51 // pred_check
        %p574 = pneg %p177
      $region62: #{vae_encoder_block.2} parent=51 // pred_check_branch
        %576 = sbr.rel (%p574) target = $region64
      $region63: #{vae_encoder_block.2} parent=51 // pred_region
        %p577 = scmp.lt.s32.totalorder %s23, 1
        %s578 = scalar_select %p577, %s23, 1
        %s579 = smul.addr %s578, 8
        %s580 = scalar_lea.vmem %s5, %s579
      $region64: #{vae_encoder_block.2} parent=51 // pred_fallthru
        _
    $region52: #{vae_encoder_block.2} parent=5 // pred_fallthru
      _
  $region6: #{vae_encoder_block.2} parent=0 // loop_footer
    %s16 = sadd.s32 1, %s12
  $region7: #{vae_encoder_block.2} parent=0 // loop_footer_branch
    %11 = sbr.rel target = $region3
  $region8: #{vae_encoder_block.2} parent=0 // loop_exit
    _

</llo_original>
